<compile_context>
chip_gen: v7x
topology: tpu7x:2x2x1
jax: 0.10.0
libtpu: 0.0.40
codegen_flags: <defaults>
</compile_context>

<pallas_src>
import functools

import jax
import jax.numpy as jnp
from jax.experimental import pallas as pl
from jax.experimental.pallas import tpu as pltpu


# ----------------------------- Pallas kernels ------------------------------ #

def _count_kernel(ignore_label, lbl_ref, counts_ref):
    """Class histogram of valid pixels accumulated into counts_ref [1, C].

    Labels arrive lane-dense as a (TH_C, W) block; histogram is a short
    per-class compare + full-reduce loop.
    """
    @pl.when(pl.program_id(0) == 0)
    def _():
        counts_ref[...] = jnp.zeros_like(counts_ref)

    lbl = lbl_ref[...]                                     # (TH_C, W) int32
    valid = lbl != ignore_label
    num_classes = counts_ref.shape[1]
    lane = jax.lax.broadcasted_iota(jnp.int32, counts_ref.shape, 1)  # (1, C)
    acc = jnp.zeros(counts_ref.shape, jnp.float32)
    for c in range(num_classes):
        cnt = jnp.sum(jnp.logical_and(lbl == c, valid).astype(jnp.float32))
        acc = acc + jnp.where(lane == c, cnt, 0.0)
    counts_ref[...] += acc


def _ce_kernel(ignore_label, lbl_ref, x_ref, w_ref, loss_ref):
    """Weighted per-pixel cross entropy (reduction='none', ignored pixels -> 0).

    NCHW-native: x_ref is (1, 1, C, TH, W). The class reduction is a Python
    loop over C lane-dense (TH, W) slabs (VPU/EUP only, no XLU reduces).
    Class weights are scalars read from SMEM. Output is a lane-dense (TH, W)
    slab.
    """
    num_classes = x_ref.shape[2]
    lbl = lbl_ref[0, :, :]                                 # (TH, W) int32
    valid = lbl != ignore_label

    # running max over classes
    m = x_ref[0, 0, 0, :, :].astype(jnp.float32)
    for c in range(1, num_classes):
        m = jnp.maximum(m, x_ref[0, 0, c, :, :].astype(jnp.float32))

    # single pass over classes: sum(exp), gather logit at label, gather weight
    sumexp = jnp.zeros_like(m)
    picked = jnp.zeros_like(m)                             # x[label] - m
    w_pix = jnp.zeros_like(m)
    for c in range(num_classes):
        xc = x_ref[0, 0, c, :, :].astype(jnp.float32) - m
        sumexp = sumexp + jnp.exp(xc)
        sel = lbl == c
        picked = jnp.where(sel, xc, picked)
        w_pix = jnp.where(sel, w_ref[c], w_pix)

    nll = jnp.log(sumexp) - picked                         # -log p[label]
    loss_ref[0, 0, :, :] = jnp.where(valid, nll * w_pix, 0.0)


# ----------------------------- tiling helpers ------------------------------ #

def _round_up(x, m):
    return ((x + m - 1) // m) * m


def _pick_tile_rows(h, w, c, budget_bytes=4 * 1024 * 1024):
    """Rows of H per CE block: biggest slab within ~budget (single buffer;
    Pallas double-buffers) that satisfies the (8, 128) rule (multiple of 8 or
    the full H extent)."""
    w_pad = max(_round_up(w, 128), 128)                    # VMEM lane padding
    per_row = (c + 2) * w_pad * 4                          # logits + labels + loss
    cap = max(8, budget_bytes // per_row)
    if h <= cap:
        return h                                           # whole H in one block
    best = None
    for th in range(8, cap + 1, 8):                        # largest divisor of H
        if h % th == 0:
            best = th
    if best is not None:
        return best
    return max(8, (cap // 8) * 8)                          # caller pads H


def _pick_count_rows(rows, w, budget_bytes=2 * 1024 * 1024):
    w_pad = max(_round_up(w, 128), 128)
    cap = max(8, budget_bytes // (w_pad * 4))
    if rows <= cap:
        return rows
    return max(8, (cap // 8) * 8)                          # caller pads rows


# ------------------------------ JAX wrappers -------------------------------- #

def _class_counts(labels2d, num_classes, ignore_label, tile_rows):
    rows, w = labels2d.shape
    counts = pl.pallas_call(
        functools.partial(_count_kernel, ignore_label),
        out_shape=jax.ShapeDtypeStruct((1, num_classes), jnp.float32),
        grid=(rows // tile_rows,),
        in_specs=[pl.BlockSpec((tile_rows, w), lambda i: (i, 0))],
        out_specs=pl.BlockSpec((1, num_classes), lambda i: (0, 0)),
        compiler_params=pltpu.CompilerParams(dimension_semantics=("arbitrary",)),
    )(labels2d)
    return counts[0]                                       # [C]


def _per_pixel_ce(preds, labels_p, weights, ignore_label, tile_rows):
    """preds: [A, B, C, Hp, W]; labels_p: [B, Hp, W]; weights: [C] (f32).
    Returns weighted per-pixel loss [A, B, Hp, W] (0 for ignored pixels)."""
    a, b, c, hp, w = preds.shape
    return pl.pallas_call(
        functools.partial(_ce_kernel, ignore_label),
        out_shape=jax.ShapeDtypeStruct((a, b, hp, w), jnp.float32),
        grid=(b, hp // tile_rows, a),                      # heads innermost: label
        in_specs=[                                         # block reused across A
            pl.BlockSpec((1, tile_rows, w), lambda bi, hi, ai: (bi, hi, 0)),
            pl.BlockSpec((1, 1, c, tile_rows, w),
                         lambda bi, hi, ai: (ai, bi, 0, hi, 0)),
            pl.BlockSpec(memory_space=pltpu.MemorySpace.SMEM),   # weights (C,)
        ],
        out_specs=pl.BlockSpec((1, 1, tile_rows, w),
                               lambda bi, hi, ai: (ai, bi, hi, 0)),
        compiler_params=pltpu.CompilerParams(
            dimension_semantics=("parallel", "parallel", "parallel")),
    )(labels_p, preds, weights)


def _weights_from_counts(counts, default_weight=1.0, epsilon=1e-6, max_weight=10.0):
    """JAX port of compute_batch_class_weights, from pre-computed counts."""
    appeared = counts > 0
    inv = 1.0 / (counts + epsilon)
    inv_min = jnp.min(jnp.where(appeared, inv, jnp.inf))
    w_app = jnp.minimum(inv / inv_min, max_weight)
    return jnp.where(appeared, w_app, default_weight).astype(jnp.float32)


def _ohem_select(loss_flat, n_valid, thr, k_max):
    """OHEM reduction over one head's per-pixel loss vector."""
    # TODO(synk): data-dependent hard-example selection stays in XLA; the full
    # sort was replaced by lax.top_k with a static k = N // 16 upper bound.
    n_min = n_valid // 16
    hard = loss_flat > thr
    n_hard = jnp.sum(hard.astype(jnp.int32))
    mean_hard = jnp.sum(jnp.where(hard, loss_flat, 0.0)) / jnp.maximum(
        n_hard, 1).astype(jnp.float32)

    topv = jax.lax.top_k(loss_flat, k_max)[0]              # descending values
    csum = jnp.cumsum(topv)
    idx = jnp.clip(n_min - 1, 0, k_max - 1)
    topk_mean = csum[idx] / jnp.maximum(n_min, 1).astype(jnp.float32)

    return jnp.where(n_hard < n_min, topk_mean, mean_hard)


def _ohem_forward(preds, labels, *, thresh, ignore_label):
    """preds: [A, B, C, H, W] (stacked heads), labels: [B, H, W] -> per-head [A]."""
    a, b, c, h, w = preds.shape
    labels = labels.astype(jnp.int32)

    tile_rows = _pick_tile_rows(h, w, c)
    pad_h = (-h) % tile_rows
    if pad_h:
        # TODO(synk): padding H costs an extra HBM pass over the logits; only
        # reached when H has no usable multiple-of-8 divisor under the budget.
        preds = jnp.pad(preds, ((0, 0), (0, 0), (0, 0), (0, pad_h), (0, 0)))
        labels_p = jnp.pad(labels, ((0, 0), (0, pad_h), (0, 0)),
                           constant_values=ignore_label)
    else:
        labels_p = labels
    hp = h + pad_h

    # class histogram over valid pixels (lane-dense labels, tiny output)
    rows = b * hp
    labels2d = labels_p.reshape(rows, w)
    thc = _pick_count_rows(rows, w)
    pad_r = (-rows) % thc
    if pad_r:
        labels2d = jnp.pad(labels2d, ((0, pad_r), (0, 0)),
                           constant_values=ignore_label)
    counts = _class_counts(labels2d, c, ignore_label, thc)            # [C]
    weights = _weights_from_counts(counts)                            # [C]
    n_valid = jnp.sum(counts).astype(jnp.int32)

    # weighted per-pixel CE for all heads in one kernel invocation
    loss = _per_pixel_ce(preds, labels_p, weights, ignore_label, tile_rows)
    loss = loss[:, :, :h, :].reshape(a, b * h * w)                    # [A, N]

    thr = -jnp.log(jnp.float32(thresh))
    k_max = max((b * h * w) // 16, 1)
    return jax.vmap(lambda lf: _ohem_select(lf, n_valid, thr, k_max))(loss)


def ohem_cross_entropy_single(preds, labels, *, thresh=0.7, ignore_label=255):
    """Equivalent of OhemCrossEntropy._forward(preds, labels)."""
    return _ohem_forward(preds[None], labels, thresh=thresh,
                         ignore_label=ignore_label)[0]


def ohem_cross_entropy(preds, labels, *, thresh=0.7, ignore_label=255,
                       aux_weights=(0.25, 0.25, 0.25, 0.25, 1.0)):
    """Equivalent of OhemCrossEntropy.forward: preds may be a tuple of logits."""
    if isinstance(preds, (tuple, list)):
        m = min(len(preds), len(aux_weights))
        heads = preds[:m]
        if len({p.shape for p in heads}) == 1:
            stacked = jnp.stack(heads, axis=0)             # [A, B, C, H, W]
            per_head = _ohem_forward(stacked, labels, thresh=thresh,
                                     ignore_label=ignore_label)
            w = jnp.asarray(aux_weights[:m], jnp.float32)
            return jnp.sum(w * per_head)
        # heads with differing shapes: fall back to per-head calls
        return sum(w * ohem_cross_entropy_single(p, labels, thresh=thresh,
                                                 ignore_label=ignore_label)
                   for p, w in zip(heads, aux_weights))
    return ohem_cross_entropy_single(preds, labels, thresh=thresh,
                                     ignore_label=ignore_label)


# --------------------------------- main ------------------------------------ #

if __name__ == "__main__":
    key = jax.random.PRNGKey(0)
    k_logits, k_labels, k_ignore = jax.random.split(key, 3)

    B, C, H, W = 2, 4, 16, 16
    preds = jax.random.normal(k_logits, (B, C, H, W), dtype=jnp.float32)
    labels = jax.random.randint(k_labels, (B, H, W), 0, C, dtype=jnp.int32)
    ignore_mask = jax.random.uniform(k_ignore, (B, H, W)) < 0.1
    labels = jnp.where(ignore_mask, 255, labels)

    # --- numerical sanity check of the per-pixel CE path vs plain JAX ---
    labels_i = labels.astype(jnp.int32)
    counts_k = _class_counts(labels_i.reshape(B * H, W), C, 255,
                             _pick_count_rows(B * H, W))
    w_k = _weights_from_counts(counts_k)
    loss_k = _per_pixel_ce(preds[None], labels_i, w_k, 255,
                           _pick_tile_rows(H, W, C)).reshape(-1)

    x_flat = jnp.transpose(preds, (0, 2, 3, 1)).reshape(-1, C).astype(jnp.float32)
    y_flat = labels_i.reshape(-1)
    valid = y_flat != 255
    y_safe = jnp.where(valid, y_flat, 0)
    counts_expect = jnp.sum(jax.nn.one_hot(y_safe, C) * valid[:, None], axis=0)
    w_expect = _weights_from_counts(counts_expect)
    logp = jax.nn.log_softmax(x_flat, axis=-1)
    nll_expect = -jnp.take_along_axis(logp, y_safe[:, None], axis=1)[:, 0]
    loss_expect = jnp.where(valid, nll_expect * w_expect[y_safe], 0.0)

    assert jnp.allclose(counts_k, counts_expect, atol=0.5)
    assert jnp.allclose(loss_k, loss_expect, atol=1e-4, rtol=1e-4)

    # --- full forward, single head ---
    loss = ohem_cross_entropy(preds, labels)
    loss = jax.block_until_ready(loss)
    assert loss.shape == () and bool(jnp.isfinite(loss))

    # --- aux-heads (tuple) path: one stacked kernel invocation ---
    loss_aux = ohem_cross_entropy((preds, preds), labels)
    loss_aux = jax.block_until_ready(loss_aux)
    assert loss_aux.shape == () and bool(jnp.isfinite(loss_aux))

    print("KERNEL_OK")
</pallas_src>

<mosaic_0001>
module attributes {stable_mosaic.version = 11 : i64} {
  func.func @_count_kernel(%arg0: i32, %arg1: memref<32x16xi32, #tpu.memory_space<vmem>>, %arg2: memref<1x4xf32, #tpu.memory_space<vmem>>) attributes {dimension_semantics = [#tpu.dimension_semantics<arbitrary>], iteration_bounds = array<i64: 1>, scalar_prefetch = 0 : i64, scratch_operands = 0 : i64, tpu.core_type = #tpu.core_type<tc>, window_params = [{transform_indices = @transform_0, window_bounds = array<i64: 32, 16>}, {pipeline_mode = #tpu.pipeline_mode<synchronous>, transform_indices = @transform_1, window_bounds = array<i64: 1, 4>}]} {
    %c0_i32 = arith.constant 0 : i32
    %0 = arith.cmpi eq, %arg0, %c0_i32 : i32
    %1 = arith.extui %0 : i1 to i32
    %c0_i32_0 = arith.constant 0 : i32
    %2 = arith.cmpi ne, %1, %c0_i32_0 : i32
    scf.if %2 {
      %cst_19 = arith.constant 0.000000e+00 : f32
      %71 = vector.broadcast %cst_19 : f32 to vector<1x4xf32>
      %c0_20 = arith.constant 0 : index
      %c0_21 = arith.constant 0 : index
      %72 = vector.load %arg2[%c0_20, %c0_21] : memref<1x4xf32, #tpu.memory_space<vmem>>, vector<1x4xf32>
      tpu.vector_store %arg2[%c0_20, %c0_21], %71 {strides = array<i32>} : memref<1x4xf32, #tpu.memory_space<vmem>>, vector<1x4xf32>,
    } else {
    }
    %c0 = arith.constant 0 : index
    %c0_1 = arith.constant 0 : index
    %3 = vector.load %arg1[%c0, %c0_1] : memref<32x16xi32, #tpu.memory_space<vmem>>, vector<32x16xi32>
    %c255_i32 = arith.constant 255 : i32
    %4 = vector.broadcast %c255_i32 : i32 to vector<32x16xi32>
    %5 = arith.cmpi ne, %3, %4 : vector<32x16xi32>
    %6 = tpu.iota {dimensions = array<i32: 1>} : vector<1x4xi32>
    %cst = arith.constant 0.000000e+00 : f32
    %7 = vector.broadcast %cst : f32 to vector<1x4xf32>
    %c0_i32_2 = arith.constant 0 : i32
    %8 = vector.broadcast %c0_i32_2 : i32 to vector<32x16xi32>
    %9 = arith.cmpi eq, %3, %8 : vector<32x16xi32>
    %10 = arith.andi %9, %5 : vector<32x16xi1>
    %11 = arith.extui %10 : vector<32x16xi1> to vector<32x16xi32>
    %12 = arith.sitofp %11 : vector<32x16xi32> to vector<32x16xf32>
    %13 = vector.shape_cast %12 : vector<32x16xf32> to vector<1x32x16xf32>
    %cst_3 = arith.constant dense<0.000000e+00> : vector<1xf32>
    %14 = vector.multi_reduction <add>, %13, %cst_3 [1, 2] : vector<1x32x16xf32> to vector<1xf32>
    %15 = vector.shape_cast %14 : vector<1xf32> to vector<1x1x1xf32>
    %16 = vector.extract %15[0, 0, 0] : f32 from vector<1x1x1xf32>
    %c0_i32_4 = arith.constant 0 : i32
    %17 = vector.broadcast %c0_i32_4 : i32 to vector<1x4xi32>
    %18 = arith.cmpi eq, %6, %17 : vector<1x4xi32>
    %cst_5 = arith.constant 0.000000e+00 : f32
    %19 = vector.broadcast %16 : f32 to vector<1x4xf32>
    %20 = vector.broadcast %cst_5 : f32 to vector<1x4xf32>
    %21 = arith.select %18, %19, %20 : vector<1x4xi1>, vector<1x4xf32>
    %22 = arith.addf %7, %21 : vector<1x4xf32>
    %c1_i32 = arith.constant 1 : i32
    %23 = vector.broadcast %c1_i32 : i32 to vector<32x16xi32>
    %24 = arith.cmpi eq, %3, %23 : vector<32x16xi32>
    %25 = arith.andi %24, %5 : vector<32x16xi1>
    %26 = arith.extui %25 : vector<32x16xi1> to vector<32x16xi32>
    %27 = arith.sitofp %26 : vector<32x16xi32> to vector<32x16xf32>
    %28 = vector.shape_cast %27 : vector<32x16xf32> to vector<1x32x16xf32>
    %cst_6 = arith.constant dense<0.000000e+00> : vector<1xf32>
    %29 = vector.multi_reduction <add>, %28, %cst_6 [1, 2] : vector<1x32x16xf32> to vector<1xf32>
    %30 = vector.shape_cast %29 : vector<1xf32> to vector<1x1x1xf32>
    %31 = vector.extract %30[0, 0, 0] : f32 from vector<1x1x1xf32>
    %c1_i32_7 = arith.constant 1 : i32
    %32 = vector.broadcast %c1_i32_7 : i32 to vector<1x4xi32>
    %33 = arith.cmpi eq, %6, %32 : vector<1x4xi32>
    %cst_8 = arith.constant 0.000000e+00 : f32
    %34 = vector.broadcast %31 : f32 to vector<1x4xf32>
    %35 = vector.broadcast %cst_8 : f32 to vector<1x4xf32>
    %36 = arith.select %33, %34, %35 : vector<1x4xi1>, vector<1x4xf32>
    %37 = arith.addf %22, %36 : vector<1x4xf32>
    %c2_i32 = arith.constant 2 : i32
    %38 = vector.broadcast %c2_i32 : i32 to vector<32x16xi32>
    %39 = arith.cmpi eq, %3, %38 : vector<32x16xi32>
    %40 = arith.andi %39, %5 : vector<32x16xi1>
    %41 = arith.extui %40 : vector<32x16xi1> to vector<32x16xi32>
    %42 = arith.sitofp %41 : vector<32x16xi32> to vector<32x16xf32>
    %43 = vector.shape_cast %42 : vector<32x16xf32> to vector<1x32x16xf32>
    %cst_9 = arith.constant dense<0.000000e+00> : vector<1xf32>
    %44 = vector.multi_reduction <add>, %43, %cst_9 [1, 2] : vector<1x32x16xf32> to vector<1xf32>
    %45 = vector.shape_cast %44 : vector<1xf32> to vector<1x1x1xf32>
    %46 = vector.extract %45[0, 0, 0] : f32 from vector<1x1x1xf32>
    %c2_i32_10 = arith.constant 2 : i32
    %47 = vector.broadcast %c2_i32_10 : i32 to vector<1x4xi32>
    %48 = arith.cmpi eq, %6, %47 : vector<1x4xi32>
    %cst_11 = arith.constant 0.000000e+00 : f32
    %49 = vector.broadcast %46 : f32 to vector<1x4xf32>
    %50 = vector.broadcast %cst_11 : f32 to vector<1x4xf32>
    %51 = arith.select %48, %49, %50 : vector<1x4xi1>, vector<1x4xf32>
    %52 = arith.addf %37, %51 : vector<1x4xf32>
    %c3_i32 = arith.constant 3 : i32
    %53 = vector.broadcast %c3_i32 : i32 to vector<32x16xi32>
    %54 = arith.cmpi eq, %3, %53 : vector<32x16xi32>
    %55 = arith.andi %54, %5 : vector<32x16xi1>
    %56 = arith.extui %55 : vector<32x16xi1> to vector<32x16xi32>
    %57 = arith.sitofp %56 : vector<32x16xi32> to vector<32x16xf32>
    %58 = vector.shape_cast %57 : vector<32x16xf32> to vector<1x32x16xf32>
    %cst_12 = arith.constant dense<0.000000e+00> : vector<1xf32>
    %59 = vector.multi_reduction <add>, %58, %cst_12 [1, 2] : vector<1x32x16xf32> to vector<1xf32>
    %60 = vector.shape_cast %59 : vector<1xf32> to vector<1x1x1xf32>
    %61 = vector.extract %60[0, 0, 0] : f32 from vector<1x1x1xf32>
    %c3_i32_13 = arith.constant 3 : i32
    %62 = vector.broadcast %c3_i32_13 : i32 to vector<1x4xi32>
    %63 = arith.cmpi eq, %6, %62 : vector<1x4xi32>
    %cst_14 = arith.constant 0.000000e+00 : f32
    %64 = vector.broadcast %61 : f32 to vector<1x4xf32>
    %65 = vector.broadcast %cst_14 : f32 to vector<1x4xf32>
    %66 = arith.select %63, %64, %65 : vector<1x4xi1>, vector<1x4xf32>
    %67 = arith.addf %52, %66 : vector<1x4xf32>
    %c0_15 = arith.constant 0 : index
    %c0_16 = arith.constant 0 : index
    %68 = vector.load %arg2[%c0_15, %c0_16] : memref<1x4xf32, #tpu.memory_space<vmem>>, vector<1x4xf32>
    %69 = arith.addf %68, %67 : vector<1x4xf32>
    %c0_17 = arith.constant 0 : index
    %c0_18 = arith.constant 0 : index
    %70 = vector.load %arg2[%c0_17, %c0_18] : memref<1x4xf32, #tpu.memory_space<vmem>>, vector<1x4xf32>
    tpu.vector_store %arg2[%c0_17, %c0_18], %69 {strides = array<i32>} : memref<1x4xf32, #tpu.memory_space<vmem>>, vector<1x4xf32>,
    return
  }
  func.func @transform_0(%arg0: i32) -> (i32, i32) {
    %c0_i32 = arith.constant 0 : i32
    %c0_i32_0 = arith.constant 0 : i32
    return %arg0, %c0_i32 : i32, i32
  }
  func.func @transform_1(%arg0: i32) -> (i32, i32) {
    %c0_i32 = arith.constant 0 : i32
    %c0_i32_0 = arith.constant 0 : i32
    %c0_i32_1 = arith.constant 0 : i32
    return %c0_i32, %c0_i32_0 : i32, i32
  }
}

</mosaic_0001>

<llo_original>
// kernel: tpu_custom_call.1
$region0: #{tpu_custom_call.1}
  #allocation0 [shape = 'u32[]', space=smem, size = 0x4, offset = 0x4, fixed_abs, tag = 'smem constant byte address 0x4 - core index']
  #allocation1 [shape = 'u32[144,128]{1,0:T(1,128)}', space=vmem, size = 0x12000, scoped, tag = 'internal scratch']
  %s0 = inlined_call_operand.vmem [shape: s32[32,16], index: 0, kind: input, shape index: {}]
  %s1 = inlined_call_operand.hbm [shape: f32[1,4], index: 1, kind: output, shape index: {}]
  %s2 = sld [smem:[#allocation0]]
  $region18: #{tpu_custom_call.1} parent=0
    _
  %s4 = ssub.s32 1, %s2
  %s5 = scalar_select 0, %s4, %s2
  $region1: #{tpu_custom_call.1} parent=0
    #allocation2 [shape = 'u8[512]{0}', space=vmem, size = 0x400, scoped, tag = 'output window, operand 0, single buffered']
    #allocation3 [shape = 's32[1]{0}', space=sflag, size = 0x4, scoped, tag = 'scoped memory for tpu_custom_call.1']
    %6 = vsyncpa [#allocation3], 0
    // Predicated region
    $region2: #{tpu_custom_call.1} parent=1 // pred_check
      _
    $region3: #{tpu_custom_call.1} parent=1 // pred_check_branch
      %8 = sbr.rel (0) target = $region5
    $region4: #{tpu_custom_call.1} parent=1 // pred_region
      _
    $region5: #{tpu_custom_call.1} parent=1 // pred_fallthru
      _
    %p9 = scmp.eq.s32.totalorder 0, 0
    // Predicated region
    $region6: #{tpu_custom_call.1} parent=1 // pred_check
      %p10 = pneg %p9
    $region7: #{tpu_custom_call.1} parent=1 // pred_check_branch
      %12 = sbr.rel (%p10) target = $region9
    $region8: #{tpu_custom_call.1} parent=1 // pred_region
      %vm13 = vcmask 24576
      %14 = vst.msk [vmem:[#allocation2] sm:$0x1] %vm13, 0.0
    $region9: #{tpu_custom_call.1} parent=1 // pred_fallthru
      _
    %v15 = vld [vmem:[%s0] sm:$0xff]
    %v16 = vld [vmem:[%s0 + $0x8] sm:$0xff]
    %v17 = vld [vmem:[%s0 + $0x10] sm:$0xff]
    %v18 = vld [vmem:[%s0 + $0x18] sm:$0xff]
    %vm19 = vcmp.ne.s32.totalorder %v15, 255
    %vm20 = vcmp.ne.s32.totalorder %v16, 255
    %vm21 = vcmp.ne.s32.totalorder %v17, 255
    %vm22 = vcmp.ne.s32.totalorder %v18, 255
    %v23 = vlaneseq
    %v24 = vand.u32 %v23, 127
    %vm25 = vcmp.eq.s32.totalorder %v15, 0
    %vm26 = vcmp.eq.s32.totalorder %v16, 0
    %vm27 = vcmp.eq.s32.totalorder %v17, 0
    %vm28 = vcmp.eq.s32.totalorder %v18, 0
    %vm29 = vmand %vm25, %vm19
    %vm30 = vmand %vm26, %vm20
    %vm31 = vmand %vm27, %vm21
    %vm32 = vmand %vm28, %vm22
    %v33 = vsel %vm29, 1, 0
    %v34 = vsel %vm30, 1, 0
    %v35 = vsel %vm31, 1, 0
    %v36 = vsel %vm32, 1, 0
    %v37 = vcvt.s32.f32 %v33
    %v38 = vcvt.s32.f32 %v34
    %v39 = vcvt.s32.f32 %v35
    %v40 = vcvt.s32.f32 %v36
    %vm41 = vcmask 130048
    %v42 = vsel %vm41, %v37, 0.0
    %v43 = vsel %vm41, %v38, 0.0
    %v44 = vadd.f32 %v42, %v43
    %v45 = vsel %vm41, %v39, 0.0
    %v46 = vadd.f32 %v44, %v45
    %v47 = vsel %vm41, %v40, 0.0
    %v48 = vadd.f32 %v46, %v47
    %49 = vadd.xlane.f32.xlu0 %v48
    %v50 = vpop.xlane.xlu0 %49
    %v51 = vrot.slane %v50, 4
    %v52 = vadd.f32 %v50, %v51
    %v53 = vrot.slane %v52, 2
    %v54 = vadd.f32 %v52, %v53
    %v55 = vrot.slane %v54, 1
    %v56 = vadd.f32 %v54, %v55
    %s57 = vtos %v56
    %vm58 = vcmp.eq.s32.totalorder %v24, 0
    %v59 = vstv %s57
    %v60 = vsel %vm58, %v59, 0.0
    %v61 = vadd.f32 %v60, 0.0
    %vm62 = vcmp.eq.s32.totalorder %v15, 1
    %vm63 = vcmp.eq.s32.totalorder %v16, 1
    %vm64 = vcmp.eq.s32.totalorder %v17, 1
    %vm65 = vcmp.eq.s32.totalorder %v18, 1
    %vm66 = vmand %vm62, %vm19
    %vm67 = vmand %vm63, %vm20
    %vm68 = vmand %vm64, %vm21
    %vm69 = vmand %vm65, %vm22
    %v70 = vsel %vm66, 1, 0
    %v71 = vsel %vm67, 1, 0
    %v72 = vsel %vm68, 1, 0
    %v73 = vsel %vm69, 1, 0
    %v74 = vcvt.s32.f32 %v70
    %v75 = vcvt.s32.f32 %v71
    %v76 = vcvt.s32.f32 %v72
    %v77 = vcvt.s32.f32 %v73
    %v78 = vsel %vm41, %v74, 0.0
    %v79 = vsel %vm41, %v75, 0.0
    %v80 = vadd.f32 %v78, %v79
    %v81 = vsel %vm41, %v76, 0.0
    %v82 = vadd.f32 %v80, %v81
    %v83 = vsel %vm41, %v77, 0.0
    %v84 = vadd.f32 %v82, %v83
    %85 = vadd.xlane.f32.xlu0 %v84
    %v86 = vpop.xlane.xlu0 %85
    %v87 = vrot.slane %v86, 4
    %v88 = vadd.f32 %v86, %v87
    %v89 = vrot.slane %v88, 2
    %v90 = vadd.f32 %v88, %v89
    %v91 = vrot.slane %v90, 1
    %v92 = vadd.f32 %v90, %v91
    %s93 = vtos %v92
    %vm94 = vcmp.eq.s32.totalorder %v24, 1
    %v95 = vstv %s93
    %v96 = vsel %vm94, %v95, 0.0
    %v97 = vadd.f32 %v61, %v96
    %vm98 = vcmp.eq.s32.totalorder %v15, 2
    %vm99 = vcmp.eq.s32.totalorder %v16, 2
    %vm100 = vcmp.eq.s32.totalorder %v17, 2
    %vm101 = vcmp.eq.s32.totalorder %v18, 2
    %vm102 = vmand %vm98, %vm19
    %vm103 = vmand %vm99, %vm20
    %vm104 = vmand %vm100, %vm21
    %vm105 = vmand %vm101, %vm22
    %v106 = vsel %vm102, 1, 0
    %v107 = vsel %vm103, 1, 0
    %v108 = vsel %vm104, 1, 0
    %v109 = vsel %vm105, 1, 0
    %v110 = vcvt.s32.f32 %v106
    %v111 = vcvt.s32.f32 %v107
    %v112 = vcvt.s32.f32 %v108
    %v113 = vcvt.s32.f32 %v109
    %v114 = vsel %vm41, %v110, 0.0
    %v115 = vsel %vm41, %v111, 0.0
    %v116 = vadd.f32 %v114, %v115
    %v117 = vsel %vm41, %v112, 0.0
    %v118 = vadd.f32 %v116, %v117
    %v119 = vsel %vm41, %v113, 0.0
    %v120 = vadd.f32 %v118, %v119
    %121 = vadd.xlane.f32.xlu0 %v120
    %v122 = vpop.xlane.xlu0 %121
    %v123 = vrot.slane %v122, 4
    %v124 = vadd.f32 %v122, %v123
    %v125 = vrot.slane %v124, 2
    %v126 = vadd.f32 %v124, %v125
    %v127 = vrot.slane %v126, 1
    %v128 = vadd.f32 %v126, %v127
    %s129 = vtos %v128
    %vm130 = vcmp.eq.s32.totalorder %v24, 2
    %v131 = vstv %s129
    %v132 = vsel %vm130, %v131, 0.0
    %v133 = vadd.f32 %v97, %v132
    %vm134 = vcmp.eq.s32.totalorder %v15, 3
    %vm135 = vcmp.eq.s32.totalorder %v16, 3
    %vm136 = vcmp.eq.s32.totalorder %v17, 3
    %vm137 = vcmp.eq.s32.totalorder %v18, 3
    %vm138 = vmand %vm134, %vm19
    %vm139 = vmand %vm135, %vm20
    %vm140 = vmand %vm136, %vm21
    %vm141 = vmand %vm137, %vm22
    %v142 = vsel %vm138, 1, 0
    %v143 = vsel %vm139, 1, 0
    %v144 = vsel %vm140, 1, 0
    %v145 = vsel %vm141, 1, 0
    %v146 = vcvt.s32.f32 %v142
    %v147 = vcvt.s32.f32 %v143
    %v148 = vcvt.s32.f32 %v144
    %v149 = vcvt.s32.f32 %v145
    %v150 = vsel %vm41, %v146, 0.0
    %v151 = vsel %vm41, %v147, 0.0
    %v152 = vadd.f32 %v150, %v151
    %v153 = vsel %vm41, %v148, 0.0
    %v154 = vadd.f32 %v152, %v153
    %v155 = vsel %vm41, %v149, 0.0
    %v156 = vadd.f32 %v154, %v155
    %157 = vadd.xlane.f32.xlu0 %v156
    %v158 = vpop.xlane.xlu0 %157
    %v159 = vrot.slane %v158, 4
    %v160 = vadd.f32 %v158, %v159
    %v161 = vrot.slane %v160, 2
    %v162 = vadd.f32 %v160, %v161
    %v163 = vrot.slane %v162, 1
    %v164 = vadd.f32 %v162, %v163
    %s165 = vtos %v164
    %vm166 = vcmp.eq.s32.totalorder %v24, 3
    %v167 = vstv %s165
    %v168 = vsel %vm166, %v167, 0.0
    %v169 = vadd.f32 %v133, %v168
    %v170 = vld [vmem:[#allocation2] sm:$0x1]
    %v171 = vadd.f32 %v170, %v169
    %vm172 = vcmask 24576
    %173 = vst.msk [vmem:[#allocation2] sm:$0x1] %vm172, %v171
    // Predicated region
    $region10: #{tpu_custom_call.1} parent=1 // pred_check
      _
    $region11: #{tpu_custom_call.1} parent=1 // pred_check_branch
      %175 = sbr.rel (0) target = $region13
    $region12: #{tpu_custom_call.1} parent=1 // pred_region
      %s177 = ssub.s32 16, 16
      %178 = vsyncadd [#allocation3], %s177
      %s180 = sshll.u32 [#allocation2], 4
      %s181 = int_to_ptr.vmem [resolvable:$true] %s180
      %183 = dma.vmem_to_hbm [thread:$0]  %s181, 16, %s1, [#allocation3]
    $region13: #{tpu_custom_call.1} parent=1 // pred_fallthru
      _
    // Predicated region
    $region14: #{tpu_custom_call.1} parent=1 // pred_check
      _
    $region15: #{tpu_custom_call.1} parent=1 // pred_check_branch
      %185 = sbr.rel (0) target = $region17
    $region16: #{tpu_custom_call.1} parent=1 // pred_region
      %186 = dma.done [#allocation3], 16
    $region17: #{tpu_custom_call.1} parent=1 // pred_fallthru
      _
    %187 = vsyncpa [#allocation3], 1

</llo_original>
